<compile_context>
chip_gen: v7x
topology: tpu7x:2x2x1
jax: 0.10.0
libtpu: 0.0.40
codegen_flags: <defaults>
</compile_context>

<pallas_src>
import functools

import jax
import jax.numpy as jnp
from jax.experimental import pallas as pl
from jax.experimental.pallas import tpu as pltpu


class _SublaneWriter:
    """Streams (rows, tn) pieces into o_ref with sublane-aligned grouped stores."""

    def __init__(self, o_ref, align):
        self.o_ref = o_ref
        self.align = align          # rows per full vreg sublane group (8 f32 / 16 bf16)
        self.off = 0                # static Python offset
        self.pending = []
        self.pending_rows = 0

    def push(self, piece):
        self.pending.append(piece)
        self.pending_rows += piece.shape[0]
        # Flush when the store end lands on a full-vreg boundary (unmasked vst),
        # or cap the buffered rows so live values stay bounded.
        if (self.off + self.pending_rows) % self.align == 0 or self.pending_rows >= 2 * self.align:
            self.flush()

    def flush(self):
        if not self.pending:
            return
        rows = self.pending_rows
        slab = self.pending[0] if len(self.pending) == 1 else jnp.concatenate(self.pending, axis=0)
        self.o_ref[self.off:self.off + rows, :] = slab.astype(self.o_ref.dtype)
        self.off += rows
        self.pending = []
        self.pending_rows = 0


def _embed_kernel(x_ref, o_ref, *, freq_bands, include_input, periodic_fns, use_recurrence):
    # x_ref: (d, tn)        -- N on the 128-lane axis (lane-dense)
    # o_ref: (out_dim, tn)  -- concatenation order lives on the sublane axis
    x = x_ref[...].astype(jnp.float32)  # upcast once; compute in f32 (v5e has no bf16 VPU/EUP)

    itemsize = jnp.dtype(o_ref.dtype).itemsize
    align = 8 * max(1, 4 // itemsize)   # sublanes per vreg row-group for the output dtype
    w = _SublaneWriter(o_ref, align)

    if include_input:
        w.push(x)

    if freq_bands:
        if use_recurrence:
            # Bands are exact ratio-2 and every periodic_fn is jnp.sin / jnp.cos.
            # 2 transcendentals per element total; octaves via double-angle.
            f0 = freq_bands[0]
            theta = x if f0 == 1.0 else x * f0
            s = jnp.sin(theta)
            c = jnp.cos(theta)
            for k in range(len(freq_bands)):
                if k > 0:
                    s, c = 2.0 * s * c, 2.0 * c * c - 1.0   # (old s, old c) on the RHS
                for p_fn in periodic_fns:
                    w.push(s if p_fn is jnp.sin else c)
        else:
            # Exact fallback: direct per-band transcendental calls (static unroll).
            for f in freq_bands:
                xf = x * f
                for p_fn in periodic_fns:
                    w.push(p_fn(xf))

    w.flush()


class Embedder:
    """JAX/Pallas port of the PyTorch Embedder module."""

    def __init__(self, **kwargs):
        self.kwargs = kwargs
        d = kwargs["input_dims"]
        out_dim = 0
        if kwargs["include_input"]:
            out_dim += d
        max_freq = kwargs["max_freq_log2"]
        n_freqs = kwargs["num_freqs"]
        if kwargs["log_sampling"]:
            self.freq_bands = 2.0 ** jnp.linspace(0.0, max_freq, n_freqs)
        else:
            self.freq_bands = jnp.linspace(2.0 ** 0.0, 2.0 ** max_freq, n_freqs)
        out_dim += d * n_freqs * len(kwargs["periodic_fns"])
        self.out_dim = out_dim
        self.input_dims = d

        # static frequency constants baked into the kernel
        self._freqs = tuple(float(f) for f in self.freq_bands)
        fns = tuple(kwargs["periodic_fns"])
        ratio2 = all(
            abs(self._freqs[k + 1] - 2.0 * self._freqs[k]) <= 1e-6 * abs(self._freqs[k + 1])
            for k in range(len(self._freqs) - 1)
        )
        fns_sincos = len(fns) > 0 and all((fn is jnp.sin) or (fn is jnp.cos) for fn in fns)
        # TODO(synk): could also add an angle-addition recurrence for linear sampling.
        self._recurrence_ok = len(self._freqs) >= 1 and ratio2 and fns_sincos

    def __call__(self, inputs, *, tn=32768, transpose_output=True, use_recurrence=True):
        d = self.input_dims
        orig_shape = inputs.shape

        if inputs.ndim == 0:
            # matches torch.stack(outputs, -1) for scalar inputs (only meaningful for d==1)
            assert d == 1, "scalar input requires input_dims == 1"
            batch_shape = ()
            x = inputs.reshape(1, 1)
        else:
            assert orig_shape[-1] == d, f"expected trailing dim {d}, got {orig_shape}"
            batch_shape = orig_shape[:-1]
            x = inputs.reshape(-1, d)
        n = x.shape[0]

        # degenerate configs or empty input
        if self.out_dim == 0 or n == 0:
            if transpose_output:
                return jnp.zeros((*batch_shape, self.out_dim), inputs.dtype)
            return jnp.zeros((self.out_dim, *batch_shape), inputs.dtype)

        # transposed, lane-dense layout: (d, N) in, (out_dim, N) out
        # (input-side transpose is ~14% of kernel traffic; callers already holding
        #  a (d, N) layout could skip it, see perf notes)
        xt = x.T

        itemsize = jnp.dtype(inputs.dtype).itemsize
        per_col_bytes = (d + self.out_dim) * itemsize

        # Column tile: multiple of 128, big enough to amortize the ~0.35us/step
        # overhead, small enough that double-buffered blocks stay <= ~28 MiB
        # (inside the raised 40 MiB scoped limit on every generation, and well
        # under v7x's 64 MiB physical VMEM).
        tn_cap = max(128, ((28 * 1024 * 1024) // (2 * per_col_bytes) // 128) * 128)
        # force >=2 grid steps for non-tiny N so both TensorCores get work on v7x
        min_steps = 2 if n >= 2048 else 1
        tn_for_steps = -(-pl.cdiv(n, min_steps) // 128) * 128
        tn_eff = max(128, min(tn, tn_cap, tn_for_steps))
        grid = (pl.cdiv(n, tn_eff),)

        use_rec = bool(use_recurrence) and self._recurrence_ok
        periodic_fns = tuple(self.kwargs["periodic_fns"])
        n_pieces = len(self._freqs) * len(periodic_fns)

        kernel = functools.partial(
            _embed_kernel,
            freq_bands=self._freqs,                      # static consts
            include_input=bool(self.kwargs["include_input"]),
            periodic_fns=periodic_fns,
            use_recurrence=use_rec,
        )

        cost = pl.CostEstimate(
            flops=int(4 * n * d * max(n_pieces, 1)),
            transcendentals=int(n * d * (2 if use_rec else max(n_pieces, 1))),
            bytes_accessed=int(n * (d + self.out_dim) * itemsize),
        )

        out_t = pl.pallas_call(
            kernel,
            out_shape=jax.ShapeDtypeStruct((self.out_dim, n), inputs.dtype),
            grid_spec=pltpu.PrefetchScalarGridSpec(
                num_scalar_prefetch=0,
                grid=grid,
                # d / out_dim equal the full array dims (sublane-axis exception);
                # tn_eff is a multiple of 128 (lane axis); the ragged last block
                # in N is handled by Pallas (padded reads, masked writeback).
                in_specs=[pl.BlockSpec((d, tn_eff), lambda i: (0, i))],
                out_specs=pl.BlockSpec((self.out_dim, tn_eff), lambda i: (0, i)),
            ),
            compiler_params=pltpu.CompilerParams(
                # single parallel axis: shards grid steps across TensorCores on v7x
                dimension_semantics=("parallel",),
                vmem_limit_bytes=40 * 1024 * 1024,
            ),
            cost_estimate=cost,
        )(xt)

        if not transpose_output:
            # Fast path: keep the lane-dense feature-major layout (out_dim, ...).
            # A downstream matmul can fold this in: x @ W == (W.T @ x_t).T.
            return out_t.reshape(self.out_dim, *batch_shape)

        # PyTorch-compatible layout (..., out_dim); costs one XLA transpose over
        # the full output — prefer transpose_output=False when the consumer can
        # take the feature-major layout.
        out = out_t.T
        return out.reshape(*batch_shape, self.out_dim)


def _reference_embed(embedder, inputs):
    """Pure-JAX reference matching the PyTorch forward."""
    outs = []
    if embedder.kwargs["include_input"]:
        outs.append(inputs)
    for f in embedder.freq_bands:
        for p_fn in embedder.kwargs["periodic_fns"]:
            outs.append(p_fn(inputs * f))
    return jnp.concatenate(outs, axis=-1)


if __name__ == "__main__":
    key = jax.random.PRNGKey(0)

    # small NeRF-like config: 4-D inputs, 6 frequencies (1,2,4,8,16,32), sin/cos
    embedder = Embedder(
        input_dims=4,
        include_input=True,
        max_freq_log2=5,
        num_freqs=6,
        log_sampling=True,
        periodic_fns=(jnp.sin, jnp.cos),
    )

    # batch of 2 rays x 100 samples x 4 dims -> (200, 4) internally
    # (200 is deliberately NOT a multiple of 128 to exercise the ragged block path)
    x = jax.random.normal(key, (2, 100, 4), dtype=jnp.float32)
    ref = _reference_embed(embedder, x)

    # default path (PyTorch layout) with the double-angle recurrence
    out = jax.block_until_ready(embedder(x))
    assert out.shape == (2, 100, embedder.out_dim), out.shape
    assert jnp.allclose(out, ref, atol=1e-4, rtol=1e-4), "recurrence path mismatch vs reference"

    # exact fallback path (direct sin/cos) at tighter tolerance
    out_exact = jax.block_until_ready(embedder(x, use_recurrence=False))
    assert jnp.allclose(out_exact, ref, atol=1e-5, rtol=1e-5), "exact path mismatch vs reference"

    # feature-major fast path (no wrapper-side output transpose)
    out_fm = jax.block_until_ready(embedder(x, transpose_output=False))
    assert out_fm.shape == (embedder.out_dim, 2, 100), out_fm.shape
    assert jnp.allclose(jnp.moveaxis(out_fm, 0, -1), ref, atol=1e-4, rtol=1e-4), \
        "feature-major path mismatch vs reference"

    print("KERNEL_OK")
</pallas_src>

<mosaic_0001>
module attributes {stable_mosaic.version = 11 : i64} {
  func.func @_embed_kernel(%arg0: i32, %arg1: memref<4x256xf32, #tpu.memory_space<vmem>>, %arg2: memref<52x256xf32, #tpu.memory_space<vmem>>) attributes {dimension_semantics = [#tpu.dimension_semantics<parallel>], iteration_bounds = array<i64: 1>, scalar_prefetch = 0 : i64, scratch_operands = 0 : i64, tpu.core_type = #tpu.core_type<tc>, window_params = [{transform_indices = @transform_0, window_bounds = array<i64: 4, 256>}, {transform_indices = @transform_1, window_bounds = array<i64: 52, 256>}]} {
    %c0 = arith.constant 0 : index
    %c0_0 = arith.constant 0 : index
    %0 = vector.load %arg1[%c0, %c0_0] : memref<4x256xf32, #tpu.memory_space<vmem>>, vector<4x256xf32>
    %1 = math.sin %0 : vector<4x256xf32>
    %2 = math.cos %0 : vector<4x256xf32>
    %3 = tpu.concatenate %0, %1 in 0 : vector<4x256xf32>, vector<4x256xf32> -> vector<8x256xf32>
    %c0_1 = arith.constant 0 : index
    %c0_2 = arith.constant 0 : index
    %4 = vector.load %arg2[%c0_1, %c0_2] : memref<52x256xf32, #tpu.memory_space<vmem>>, vector<8x256xf32>
    tpu.vector_store %arg2[%c0_1, %c0_2], %3 {strides = array<i32>} : memref<52x256xf32, #tpu.memory_space<vmem>>, vector<8x256xf32>,
    %cst = arith.constant 2.000000e+00 : f32
    %5 = vector.broadcast %cst : f32 to vector<4x256xf32>
    %6 = arith.mulf %5, %1 : vector<4x256xf32>
    %7 = arith.mulf %6, %2 : vector<4x256xf32>
    %cst_3 = arith.constant 2.000000e+00 : f32
    %8 = vector.broadcast %cst_3 : f32 to vector<4x256xf32>
    %9 = arith.mulf %8, %2 : vector<4x256xf32>
    %10 = arith.mulf %9, %2 : vector<4x256xf32>
    %cst_4 = arith.constant 1.000000e+00 : f32
    %11 = vector.broadcast %cst_4 : f32 to vector<4x256xf32>
    %12 = arith.subf %10, %11 : vector<4x256xf32>
    %13 = tpu.concatenate %2, %7 in 0 : vector<4x256xf32>, vector<4x256xf32> -> vector<8x256xf32>
    %c8 = arith.constant 8 : index
    %c0_5 = arith.constant 0 : index
    %14 = vector.load %arg2[%c8, %c0_5] : memref<52x256xf32, #tpu.memory_space<vmem>>, vector<8x256xf32>
    tpu.vector_store %arg2[%c8, %c0_5], %13 {strides = array<i32>} : memref<52x256xf32, #tpu.memory_space<vmem>>, vector<8x256xf32>,
    %cst_6 = arith.constant 2.000000e+00 : f32
    %15 = vector.broadcast %cst_6 : f32 to vector<4x256xf32>
    %16 = arith.mulf %15, %7 : vector<4x256xf32>
    %17 = arith.mulf %16, %12 : vector<4x256xf32>
    %cst_7 = arith.constant 2.000000e+00 : f32
    %18 = vector.broadcast %cst_7 : f32 to vector<4x256xf32>
    %19 = arith.mulf %18, %12 : vector<4x256xf32>
    %20 = arith.mulf %19, %12 : vector<4x256xf32>
    %cst_8 = arith.constant 1.000000e+00 : f32
    %21 = vector.broadcast %cst_8 : f32 to vector<4x256xf32>
    %22 = arith.subf %20, %21 : vector<4x256xf32>
    %23 = tpu.concatenate %12, %17 in 0 : vector<4x256xf32>, vector<4x256xf32> -> vector<8x256xf32>
    %c16 = arith.constant 16 : index
    %c0_9 = arith.constant 0 : index
    %24 = vector.load %arg2[%c16, %c0_9] : memref<52x256xf32, #tpu.memory_space<vmem>>, vector<8x256xf32>
    tpu.vector_store %arg2[%c16, %c0_9], %23 {strides = array<i32>} : memref<52x256xf32, #tpu.memory_space<vmem>>, vector<8x256xf32>,
    %cst_10 = arith.constant 2.000000e+00 : f32
    %25 = vector.broadcast %cst_10 : f32 to vector<4x256xf32>
    %26 = arith.mulf %25, %17 : vector<4x256xf32>
    %27 = arith.mulf %26, %22 : vector<4x256xf32>
    %cst_11 = arith.constant 2.000000e+00 : f32
    %28 = vector.broadcast %cst_11 : f32 to vector<4x256xf32>
    %29 = arith.mulf %28, %22 : vector<4x256xf32>
    %30 = arith.mulf %29, %22 : vector<4x256xf32>
    %cst_12 = arith.constant 1.000000e+00 : f32
    %31 = vector.broadcast %cst_12 : f32 to vector<4x256xf32>
    %32 = arith.subf %30, %31 : vector<4x256xf32>
    %33 = tpu.concatenate %22, %27 in 0 : vector<4x256xf32>, vector<4x256xf32> -> vector<8x256xf32>
    %c24 = arith.constant 24 : index
    %c0_13 = arith.constant 0 : index
    %34 = vector.load %arg2[%c24, %c0_13] : memref<52x256xf32, #tpu.memory_space<vmem>>, vector<8x256xf32>
    tpu.vector_store %arg2[%c24, %c0_13], %33 {strides = array<i32>} : memref<52x256xf32, #tpu.memory_space<vmem>>, vector<8x256xf32>,
    %cst_14 = arith.constant 2.000000e+00 : f32
    %35 = vector.broadcast %cst_14 : f32 to vector<4x256xf32>
    %36 = arith.mulf %35, %27 : vector<4x256xf32>
    %37 = arith.mulf %36, %32 : vector<4x256xf32>
    %cst_15 = arith.constant 2.000000e+00 : f32
    %38 = vector.broadcast %cst_15 : f32 to vector<4x256xf32>
    %39 = arith.mulf %38, %32 : vector<4x256xf32>
    %40 = arith.mulf %39, %32 : vector<4x256xf32>
    %cst_16 = arith.constant 1.000000e+00 : f32
    %41 = vector.broadcast %cst_16 : f32 to vector<4x256xf32>
    %42 = arith.subf %40, %41 : vector<4x256xf32>
    %43 = tpu.concatenate %32, %37 in 0 : vector<4x256xf32>, vector<4x256xf32> -> vector<8x256xf32>
    %c32 = arith.constant 32 : index
    %c0_17 = arith.constant 0 : index
    %44 = vector.load %arg2[%c32, %c0_17] : memref<52x256xf32, #tpu.memory_space<vmem>>, vector<8x256xf32>
    tpu.vector_store %arg2[%c32, %c0_17], %43 {strides = array<i32>} : memref<52x256xf32, #tpu.memory_space<vmem>>, vector<8x256xf32>,
    %cst_18 = arith.constant 2.000000e+00 : f32
    %45 = vector.broadcast %cst_18 : f32 to vector<4x256xf32>
    %46 = arith.mulf %45, %37 : vector<4x256xf32>
    %47 = arith.mulf %46, %42 : vector<4x256xf32>
    %cst_19 = arith.constant 2.000000e+00 : f32
    %48 = vector.broadcast %cst_19 : f32 to vector<4x256xf32>
    %49 = arith.mulf %48, %42 : vector<4x256xf32>
    %50 = arith.mulf %49, %42 : vector<4x256xf32>
    %cst_20 = arith.constant 1.000000e+00 : f32
    %51 = vector.broadcast %cst_20 : f32 to vector<4x256xf32>
    %52 = arith.subf %50, %51 : vector<4x256xf32>
    %53 = tpu.concatenate %42, %47 in 0 : vector<4x256xf32>, vector<4x256xf32> -> vector<8x256xf32>
    %c40 = arith.constant 40 : index
    %c0_21 = arith.constant 0 : index
    %54 = vector.load %arg2[%c40, %c0_21] : memref<52x256xf32, #tpu.memory_space<vmem>>, vector<8x256xf32>
    tpu.vector_store %arg2[%c40, %c0_21], %53 {strides = array<i32>} : memref<52x256xf32, #tpu.memory_space<vmem>>, vector<8x256xf32>,
    %c48 = arith.constant 48 : index
    %c0_22 = arith.constant 0 : index
    %55 = vector.load %arg2[%c48, %c0_22] : memref<52x256xf32, #tpu.memory_space<vmem>>, vector<4x256xf32>
    tpu.vector_store %arg2[%c48, %c0_22], %52 {strides = array<i32>} : memref<52x256xf32, #tpu.memory_space<vmem>>, vector<4x256xf32>,
    return
  }
  func.func @transform_0(%arg0: i32) -> (i32, i32) {
    %c0_i32 = arith.constant 0 : i32
    %c0_i32_0 = arith.constant 0 : i32
    return %c0_i32, %arg0 : i32, i32
  }
  func.func @transform_1(%arg0: i32) -> (i32, i32) {
    %c0_i32 = arith.constant 0 : i32
    %c0_i32_0 = arith.constant 0 : i32
    return %c0_i32, %arg0 : i32, i32
  }
}

</mosaic_0001>

<llo_original>
// kernel: tpu_custom_call.1
$region0: #{tpu_custom_call.1}
  #allocation0 [shape = 'u32[]', space=smem, size = 0x4, offset = 0x4, fixed_abs, tag = 'smem constant byte address 0x4 - core index']
  #allocation1 [shape = 'u32[144,128]{1,0:T(1,128)}', space=vmem, size = 0x12000, scoped, tag = 'internal scratch']
  %s0 = inlined_call_operand.hbm [shape: f32[4,200], index: 0, kind: input, shape index: {}]
  %s1 = inlined_call_operand.hbm [shape: f32[52,200], index: 1, kind: output, shape index: {}]
  %s2 = sld [smem:[#allocation0]]
  $region18: #{tpu_custom_call.1} parent=0
    _
  %s4 = ssub.s32 1, %s2
  %s5 = scalar_select 0, %s4, %s2
  $region1: #{tpu_custom_call.1} parent=0
    #allocation2 [shape = 'u8[4096]{0}', space=vmem, size = 0x1000, scoped, tag = 'input window, operand 0, single buffered']
    #allocation3 [shape = 's32[1]{0}', space=sflag, size = 0x4, scoped, tag = 'scoped memory for tpu_custom_call.1']
    #allocation4 [shape = 's32[1]{0}', space=sflag, size = 0x4, scoped, tag = 'scoped memory for tpu_custom_call.1']
    #allocation5 [shape = 'u8[57344]{0}', space=vmem, size = 0xe000, scoped, tag = 'output window, operand 0, single buffered']
    %6 = vsyncpa [#allocation3], 0
    %7 = vsyncpa [#allocation4], 0
    // Predicated region
    $region2: #{tpu_custom_call.1} parent=1 // pred_check
      _
    $region3: #{tpu_custom_call.1} parent=1 // pred_check_branch
      %9 = sbr.rel (0) target = $region5
    $region4: #{tpu_custom_call.1} parent=1 // pred_region
      %s11 = ssub.s32 128, 128
      %12 = vsyncadd [#allocation3], %s11
      %s14 = sshll.u32 [#allocation2], 4
      %s15 = int_to_ptr.vmem [resolvable:$true] %s14
      %17 = dma.hbm_to_vmem [thread:$0]  %s0, 128, %s15, [#allocation3]
    $region5: #{tpu_custom_call.1} parent=1 // pred_fallthru
      _
    // Predicated region
    $region6: #{tpu_custom_call.1} parent=1 // pred_check
      _
    $region7: #{tpu_custom_call.1} parent=1 // pred_check_branch
      %19 = sbr.rel (0) target = $region9
    $region8: #{tpu_custom_call.1} parent=1 // pred_region
      %20 = dma.done [#allocation3], 128
    $region9: #{tpu_custom_call.1} parent=1 // pred_fallthru
      _
    %v21 = vld [vmem:[#allocation2] sm:$0xff]
    %v22 = vand.u32 2147483647, %v21
    %vm23 = vcmp.le.f32.partialorder %v22, 0.7853982
    %vm24 = vcmp.lt.s32.totalorder %v21, 0
    %v25 = vand.u32 %v21, 2139095040
    %v26 = vshrl.u32 %v25, 23
    %v27 = vsub.s32 %v26, 127
    %v28 = vand.u32 2147483647, %v21
    %v29 = vand.u32 %v28, 8388607
    %v30 = vor.u32 %v29, 8388608
    %v31 = vsub.s32 0, %v30
    %v32 = vadd.s32 %v27, 1
    %vm33 = vcmp.gt.s32.totalorder %v32, 0
    %v34 = vsel %vm33, %v32, 0
    %v35 = vshrl.u32 %v34, 5
    %v36 = vand.u32 %v34, 31
    %v37 = vsub.s32 32, %v36
    %v38 = vshrl.u32 683565275, %v37
    %v39 = vshll.u32 683565275, %v36
    %v40 = vshrl.u32 2475754826, %v37
    %v41 = vor.u32 %v39, %v40
    %v42 = vshll.u32 2475754826, %v36
    %v43 = vshrl.u32 2131351028, %v37
    %v44 = vor.u32 %v42, %v43
    %v45 = vshll.u32 2131351028, %v36
    %v46 = vshrl.u32 2102212464, %v37
    %v47 = vor.u32 %v45, %v46
    %v48 = vshll.u32 2102212464, %v36
    %v49 = vshrl.u32 920167782, %v37
    %v50 = vor.u32 %v48, %v49
    %v51 = vshll.u32 920167782, %v36
    %v52 = vshrl.u32 1326507024, %v37
    %v53 = vor.u32 %v51, %v52
    %vm54 = vcmp.lt.s32.totalorder %v35, 1
    %vm55 = vcmp.lt.s32.totalorder %v35, 2
    %vm56 = vcmp.lt.s32.totalorder %v35, 3
    %vm57 = vcmp.lt.s32.totalorder %v35, 4
    %v58 = vsel %vm54, %v38, %v41
    %v59 = vsel %vm57, %v47, 2102212464
    %v60 = vsel %vm56, %v44, %v59
    %v61 = vsel %vm55, %v58, %v60
    %v62 = vsel %vm54, %v41, %v44
    %v63 = vsel %vm57, %v50, 920167782
    %v64 = vsel %vm56, %v47, %v63
    %v65 = vsel %vm55, %v62, %v64
    %v66 = vsel %vm54, %v44, %v47
    %v67 = vsel %vm57, %v53, 1326507024
    %v68 = vsel %vm56, %v50, %v67
    %v69 = vsel %vm55, %v66, %v68
    %v70 = vshll.u32 %v30, 8
    %v71 = vmul.u32.u64.compose %v70, %v69
    %v72 = vextract.low.u32 %v71
    %v73 = vextract.high.u32 %v71
    %v74 = vmul.u32.u64.compose %v70, %v65
    %v75 = vextract.low.u32 %v74
    %v76 = vextract.high.u32 %v74
    %v77 = vmul.u32 %v70, %v61
    %v78 = vadd.s32 %v73, %v75
    %vm79 = vc.u32 %v73, %v75
    %v80 = vadd.s32 %v76, 1
    %v81 = vsel %vm79, %v80, %v76
    %v82 = vadd.s32 %v77, %v81
    %v83 = vadd.s32 %v82, 536870912
    %v84 = vshrl.u32 %v83, 30
    %v85 = vshll.u32 %v84, 30
    %v86 = vsub.s32 %v82, %v85
    %vm87 = vcmp.lt.s32.totalorder %v86, 0
    %v88 = vsub.s32 0, %v86
    %v89 = vsel %vm87, %v88, %v86
    %v90 = vclz %v89
    %v91 = vsub.s32 %v90, 2
    %vm92 = vcmp.gt.s32.totalorder 0, %v91
    %v93 = vsel %vm92, 0, %v91
    %v94 = vsub.s32 32, %v93
    %v95 = vshll.u32 %v86, %v93
    %v96 = vshrl.u32 %v78, %v94
    %v97 = vor.u32 %v95, %v96
    %v98 = vsub.s32 4294967266, %v93
    %v99 = vadd.s32 %v98, 127
    %v100 = vshll.u32 %v99, 23
    %v101 = vor.u32 4788187, %v100
    %v102 = vand.u32 2147483647, %v101
    %v104 = vcvt.s32.f32 %v97
    %v105 = vmul.f32 %v104, %v102
    %v106 = vxor.u32 %v105, 2147483648
    %v107 = vsel %vm24, %v106, %v105
    %v108 = vsub.s32 4, %v84
    %v109 = vsel %vm24, %v108, %v84
    %v110 = vsel %vm23, %v21, %v107
    %v111 = vsel %vm23, 0, %v109
    %v112 = vcosq.f32.pop %v110
    %v113 = vsinq.f32.pop %v110
    %vm114 = vweird.f32 %v21
    %v115 = vadd.s32 %v111, 3
    %v116 = vand.u32 %v115, 3
    %vm117 = vcmp.lt.s32.totalorder %v116, 2
    %vm118 = vcmp.eq.s32.totalorder %v116, 0
    %v119 = vxor.u32 %v113, 2147483648
    %v120 = vsel %vm118, %v112, %v119
    %vm121 = vcmp.eq.s32.totalorder %v116, 2
    %v122 = vxor.u32 %v112, 2147483648
    %v123 = vsel %vm121, %v122, %v113
    %v124 = vsel %vm117, %v120, %v123
    %v125 = vsel %vm114, nan, %v124
    %v126 = vand.u32 2147483647, %v21
    %vm127 = vcmp.le.f32.partialorder %v126, 0.7853982
    %vm128 = vcmp.lt.s32.totalorder %v21, 0
    %v129 = vand.u32 %v21, 2139095040
    %v130 = vshrl.u32 %v129, 23
    %v131 = vsub.s32 %v130, 127
    %v132 = vand.u32 2147483647, %v21
    %v133 = vand.u32 %v132, 8388607
    %v134 = vor.u32 %v133, 8388608
    %v135 = vsub.s32 0, %v134
    %v136 = vadd.s32 %v131, 1
    %vm137 = vcmp.gt.s32.totalorder %v136, 0
    %v138 = vsel %vm137, %v136, 0
    %v139 = vshrl.u32 %v138, 5
    %v140 = vand.u32 %v138, 31
    %v141 = vsub.s32 32, %v140
    %v142 = vshrl.u32 683565275, %v141
    %v143 = vshll.u32 683565275, %v140
    %v144 = vshrl.u32 2475754826, %v141
    %v145 = vor.u32 %v143, %v144
    %v146 = vshll.u32 2475754826, %v140
    %v147 = vshrl.u32 2131351028, %v141
    %v148 = vor.u32 %v146, %v147
    %v149 = vshll.u32 2131351028, %v140
    %v150 = vshrl.u32 2102212464, %v141
    %v151 = vor.u32 %v149, %v150
    %v152 = vshll.u32 2102212464, %v140
    %v153 = vshrl.u32 920167782, %v141
    %v154 = vor.u32 %v152, %v153
    %v155 = vshll.u32 920167782, %v140
    %v156 = vshrl.u32 1326507024, %v141
    %v157 = vor.u32 %v155, %v156
    %vm158 = vcmp.lt.s32.totalorder %v139, 1
    %vm159 = vcmp.lt.s32.totalorder %v139, 2
    %vm160 = vcmp.lt.s32.totalorder %v139, 3
    %vm161 = vcmp.lt.s32.totalorder %v139, 4
    %v162 = vsel %vm158, %v142, %v145
    %v163 = vsel %vm161, %v151, 2102212464
    %v164 = vsel %vm160, %v148, %v163
    %v165 = vsel %vm159, %v162, %v164
    %v166 = vsel %vm158, %v145, %v148
    %v167 = vsel %vm161, %v154, 920167782
    %v168 = vsel %vm160, %v151, %v167
    %v169 = vsel %vm159, %v166, %v168
    %v170 = vsel %vm158, %v148, %v151
    %v171 = vsel %vm161, %v157, 1326507024
    %v172 = vsel %vm160, %v154, %v171
    %v173 = vsel %vm159, %v170, %v172
    %v174 = vshll.u32 %v134, 8
    %v175 = vmul.u32.u64.compose %v174, %v173
    %v176 = vextract.low.u32 %v175
    %v177 = vextract.high.u32 %v175
    %v178 = vmul.u32.u64.compose %v174, %v169
    %v179 = vextract.low.u32 %v178
    %v180 = vextract.high.u32 %v178
    %v181 = vmul.u32 %v174, %v165
    %v182 = vadd.s32 %v177, %v179
    %vm183 = vc.u32 %v177, %v179
    %v184 = vadd.s32 %v180, 1
    %v185 = vsel %vm183, %v184, %v180
    %v186 = vadd.s32 %v181, %v185
    %v187 = vadd.s32 %v186, 536870912
    %v188 = vshrl.u32 %v187, 30
    %v189 = vshll.u32 %v188, 30
    %v190 = vsub.s32 %v186, %v189
    %vm191 = vcmp.lt.s32.totalorder %v190, 0
    %v192 = vsub.s32 0, %v190
    %v193 = vsel %vm191, %v192, %v190
    %v194 = vclz %v193
    %v195 = vsub.s32 %v194, 2
    %vm196 = vcmp.gt.s32.totalorder 0, %v195
    %v197 = vsel %vm196, 0, %v195
    %v198 = vsub.s32 32, %v197
    %v199 = vshll.u32 %v190, %v197
    %v200 = vshrl.u32 %v182, %v198
    %v201 = vor.u32 %v199, %v200
    %v202 = vsub.s32 4294967266, %v197
    %v203 = vadd.s32 %v202, 127
    %v204 = vshll.u32 %v203, 23
    %v205 = vor.u32 4788187, %v204
    %v206 = vand.u32 2147483647, %v205
    %v208 = vcvt.s32.f32 %v201
    %v209 = vmul.f32 %v208, %v206
    %v210 = vxor.u32 %v209, 2147483648
    %v211 = vsel %vm128, %v210, %v209
    %v212 = vsub.s32 4, %v188
    %v213 = vsel %vm128, %v212, %v188
    %v214 = vsel %vm127, %v21, %v211
    %v215 = vsel %vm127, 0, %v213
    %v216 = vcosq.f32.pop %v214
    %v217 = vsinq.f32.pop %v214
    %vm218 = vweird.f32 %v21
    %v219 = vand.u32 %v215, 3
    %vm220 = vcmp.lt.s32.totalorder %v219, 2
    %vm221 = vcmp.eq.s32.totalorder %v219, 0
    %v222 = vxor.u32 %v217, 2147483648
    %v223 = vsel %vm221, %v216, %v222
    %vm224 = vcmp.eq.s32.totalorder %v219, 2
    %v225 = vxor.u32 %v216, 2147483648
    %v226 = vsel %vm224, %v225, %v217
    %v227 = vsel %vm220, %v223, %v226
    %v228 = vsel %vm218, nan, %v227
    %v230 = vcombine.high %v21, %v21
    %v233 = vcombine.low %v125, %v125
    %vm235 = vcmask 1043456
    %v236 = vsel %vm235, %v21, %v233
    %v237 = vsel %vm235, %v230, %v125
    %238 = vst [vmem:[#allocation5] sm:$0xff] %v236
    %239 = vst [vmem:[#allocation5 + $0x8] sm:$0xff] %v237
    %v240 = vmul.f32 %v125, 2.0
    %v241 = vmul.f32 %v240, %v228
    %v242 = vmul.f32 %v228, 2.0
    %v243 = vmul.f32 %v242, %v228
    %v244 = vsub.f32 %v243, 1.0
    %v246 = vcombine.high %v228, %v228
    %v249 = vcombine.low %v241, %v241
    %v251 = vsel %vm235, %v228, %v249
    %v252 = vsel %vm235, %v246, %v241
    %253 = vst [vmem:[#allocation5 + $0x10] sm:$0xff] %v251
    %254 = vst [vmem:[#allocation5 + $0x18] sm:$0xff] %v252
    %v255 = vmul.f32 %v241, 2.0
    %v256 = vmul.f32 %v255, %v244
    %v257 = vmul.f32 %v244, 2.0
    %v258 = vmul.f32 %v257, %v244
    %v259 = vsub.f32 %v258, 1.0
    %v261 = vcombine.high %v244, %v244
    %v264 = vcombine.low %v256, %v256
    %v266 = vsel %vm235, %v244, %v264
    %v267 = vsel %vm235, %v261, %v256
    %268 = vst [vmem:[#allocation5 + $0x20] sm:$0xff] %v266
    %269 = vst [vmem:[#allocation5 + $0x28] sm:$0xff] %v267
    %v270 = vmul.f32 %v256, 2.0
    %v271 = vmul.f32 %v270, %v259
    %v272 = vmul.f32 %v259, 2.0
    %v273 = vmul.f32 %v272, %v259
    %v274 = vsub.f32 %v273, 1.0
    %v276 = vcombine.high %v259, %v259
    %v279 = vcombine.low %v271, %v271
    %v281 = vsel %vm235, %v259, %v279
    %v282 = vsel %vm235, %v276, %v271
    %283 = vst [vmem:[#allocation5 + $0x30] sm:$0xff] %v281
    %284 = vst [vmem:[#allocation5 + $0x38] sm:$0xff] %v282
    %v285 = vmul.f32 %v271, 2.0
    %v286 = vmul.f32 %v285, %v274
    %v287 = vmul.f32 %v274, 2.0
    %v288 = vmul.f32 %v287, %v274
    %v289 = vsub.f32 %v288, 1.0
    %v291 = vcombine.high %v274, %v274
    %v294 = vcombine.low %v286, %v286
    %v296 = vsel %vm235, %v274, %v294
    %v297 = vsel %vm235, %v291, %v286
    %298 = vst [vmem:[#allocation5 + $0x40] sm:$0xff] %v296
    %299 = vst [vmem:[#allocation5 + $0x48] sm:$0xff] %v297
    %v300 = vmul.f32 %v286, 2.0
    %v301 = vmul.f32 %v300, %v289
    %v302 = vmul.f32 %v289, 2.0
    %v303 = vmul.f32 %v302, %v289
    %v304 = vsub.f32 %v303, 1.0
    %v306 = vcombine.high %v289, %v289
    %v309 = vcombine.low %v301, %v301
    %v311 = vsel %vm235, %v289, %v309
    %v312 = vsel %vm235, %v306, %v301
    %313 = vst [vmem:[#allocation5 + $0x50] sm:$0xff] %v311
    %314 = vst [vmem:[#allocation5 + $0x58] sm:$0xff] %v312
    %v316 = vcombine.high %v304, %v304
    %318 = vst [vmem:[#allocation5 + $0x60] sm:$0xf] %v304
    %319 = vst [vmem:[#allocation5 + $0x68] sm:$0xf] %v316
    // Predicated region
    $region10: #{tpu_custom_call.1} parent=1 // pred_check
      _
    $region11: #{tpu_custom_call.1} parent=1 // pred_check_branch
      %321 = sbr.rel (0) target = $region13
    $region12: #{tpu_custom_call.1} parent=1 // pred_region
      %s323 = ssub.s32 1792, 1792
      %324 = vsyncadd [#allocation4], %s323
      %s325 = sshll.u32 [#allocation5], 4
      %s326 = int_to_ptr.vmem [resolvable:$true] %s325
      %331 = dma.vmem_to_hbm [thread:$0]  %s326, 1792, %s1, [#allocation4], 256, 256, 16
    $region13: #{tpu_custom_call.1} parent=1 // pred_fallthru
      _
    // Predicated region
    $region14: #{tpu_custom_call.1} parent=1 // pred_check
      _
    $region15: #{tpu_custom_call.1} parent=1 // pred_check_branch
      %333 = sbr.rel (0) target = $region17
    $region16: #{tpu_custom_call.1} parent=1 // pred_region
      %334 = dma.done [#allocation4], 1792
    $region17: #{tpu_custom_call.1} parent=1 // pred_fallthru
      _
    %335 = vsyncpa [#allocation3], 1
    %336 = vsyncpa [#allocation4], 1

</llo_original>
